<compile_context>
chip_gen: v7x
topology: tpu7x:2x2x1
jax: 0.10.0
libtpu: 0.0.40
codegen_flags: <defaults>
</compile_context>

<pallas_src>
import functools

import jax
import jax.numpy as jnp
from jax import lax
from jax.experimental import pallas as pl
from jax.experimental.pallas import tpu as pltpu


def _round_up(x, n):
    return ((x + n - 1) // n) * n


def _circle_loss_tile_kernel(fi_ref, fjT_ref, li_ref, lj_ref, p_ref, n_ref,
                             acc_p_ref, acc_n_ref,
                             *, m, t, has_pad, scale, margin):
    i = pl.program_id(0)
    j = pl.program_id(1)
    nj = pl.num_programs(1)

    @pl.when(j >= i)                 # tiles strictly below the diagonal do no work
    def _():
        @pl.when(j == i)             # first live tile of this row-block: reset accs
        def _():
            acc_p_ref[...] = jnp.zeros_like(acc_p_ref)
            acc_n_ref[...] = jnp.zeros_like(acc_n_ref)

        # (t, t) tile of the cosine-similarity matrix on the MXU (RHS is already
        # transposed in the wrapper, so this is a plain (t,d)x(d,t) contraction).
        sim = lax.dot_general(
            fi_ref[...], fjT_ref[...],
            dimension_numbers=(((1,), (0,)), ((), ())),
            preferred_element_type=jnp.float32)

        eq = li_ref[...] == lj_ref[...]          # (t,1)==(1,t) -> (t,t)

        # Strict-upper-triangle mask; the scalar bound only binds on diagonal
        # blocks (for j > i it is <= -t so every element passes).
        row_l = lax.broadcasted_iota(jnp.int32, (t, t), 0)
        col_l = lax.broadcasted_iota(jnp.int32, (t, t), 1)
        base = (col_l - row_l) > (i - j) * t
        if has_pad:
            # Valid-column guard (col < m) for padded columns.  Padded rows are
            # excluded automatically because row >= m forces col > row >= m.
            base = jnp.logical_and(base, col_l < (m - j * t))

        alpha_p = jnp.maximum((1.0 + margin) - sim, 0.0)   # relu(-s + 1 + margin)
        alpha_n = jnp.maximum(sim + margin, 0.0)           # relu(s + margin)
        arg_p = (-scale) * alpha_p * (sim - (1.0 - margin))
        arg_n = scale * alpha_n * (sim - margin)

        # Single EUP exp per tile; out-of-mask entries are simply never
        # accumulated.  The pos / neg sums use disjoint masks (no subtraction,
        # which previously caused catastrophic cancellation).
        e = jnp.exp(jnp.where(eq, arg_p, arg_n))
        acc_p_ref[...] += jnp.where(jnp.logical_and(base, eq), e, 0.0)
        acc_n_ref[...] += jnp.where(jnp.logical_and(base, jnp.logical_not(eq)),
                                    e, 0.0)

        @pl.when(j == nj - 1)        # one cross-lane reduction per row-block
        def _():
            p_ref[...] = jnp.sum(acc_p_ref[...], axis=1, keepdims=True)
            n_ref[...] = jnp.sum(acc_n_ref[...], axis=1, keepdims=True)


def circle_loss2(feats, labels, *, scale=32.0, margin=0.25, tile=256,
                 mxu_dtype=jnp.float32):
    """feats: (m, d) float, labels: (m,) int -> scalar float32 circle loss (cos sim)."""
    m, d = feats.shape
    feats = feats.astype(jnp.float32)

    # F.normalize(feats): rsqrt + multiply (eps folded into the squared norm).
    sumsq = jnp.sum(feats * feats, axis=-1, keepdims=True)
    fn = feats * lax.rsqrt(jnp.maximum(sumsq, 1e-24))
    fn = fn.astype(mxu_dtype)   # pass bf16 here for the fast MXU/DMA path

    # Tile sizing: tiny batches -> one 8-aligned tile; large batches -> `tile`.
    if m <= tile:
        t = _round_up(max(m, 1), 8)
        m_pad = t
    else:
        t = tile
        m_pad = _round_up(m, tile)
    nb = m_pad // t
    pad = m_pad - m

    fn = jnp.pad(fn, ((0, pad), (0, 0)))
    fnT = fn.T                                   # (d, m_pad): MXU-native RHS layout
    lab = jnp.pad(labels.astype(jnp.int32), (0, pad), constant_values=-1)
    lab_col = lab.reshape(m_pad, 1)
    lab_row = lab.reshape(1, m_pad)

    kernel = functools.partial(
        _circle_loss_tile_kernel, m=m, t=t, has_pad=(pad > 0),
        scale=float(scale), margin=float(margin))

    # TODO(synk): for very large d the (t,d)/(d,t) blocks can exceed the default
    # scoped-VMEM limit (16 MiB v5e / 32 MiB v6e,v7x); pass vmem_limit_bytes or
    # add an inner k axis over d with a (t,t) sim accumulator in that case.
    p_rows, n_rows = pl.pallas_call(
        kernel,
        out_shape=(
            jax.ShapeDtypeStruct((m_pad, 1), jnp.float32),
            jax.ShapeDtypeStruct((m_pad, 1), jnp.float32),
        ),
        grid_spec=pltpu.PrefetchScalarGridSpec(
            num_scalar_prefetch=0,
            grid=(nb, nb),
            in_specs=[
                pl.BlockSpec((t, d), lambda i, j: (i, 0)),   # row block of feats
                pl.BlockSpec((d, t), lambda i, j: (0, j)),   # col block (pre-transposed)
                pl.BlockSpec((t, 1), lambda i, j: (i, 0)),   # labels (column)
                pl.BlockSpec((1, t), lambda i, j: (0, j)),   # labels (row)
            ],
            out_specs=(
                pl.BlockSpec((t, 1), lambda i, j: (i, 0)),   # per-row loss_p
                pl.BlockSpec((t, 1), lambda i, j: (i, 0)),   # per-row loss_n
            ),
            scratch_shapes=[
                pltpu.VMEM((t, t), jnp.float32),             # lane-wide pos accumulator
                pltpu.VMEM((t, t), jnp.float32),             # lane-wide neg accumulator
            ]),
        # i axis parallel (v7x megacore); j is the reduction sweep.
        # TODO(synk): on single-TC chips (v5e/v6e) a 1-D scalar-prefetch
        # enumeration of the upper-triangular block pairs would also remove the
        # skipped tiles' DMA traffic; kept 2-D + parallel i for v7x.
        compiler_params=pltpu.CompilerParams(
            dimension_semantics=("parallel", "arbitrary")),
    )(fn, fnT, lab_col, lab_row)

    loss_p = jnp.sum(p_rows)
    loss_n = jnp.sum(n_rows)
    # TODO(synk): exp / loss_p*loss_n can overflow f32 for extreme inputs; this
    # matches the PyTorch reference formulation (a log-sum-exp accumulation
    # would be the numerically safe variant).
    return jnp.log(1.0 + loss_p * loss_n)


if __name__ == "__main__":
    key = jax.random.PRNGKey(0)
    k1, k2, k3, k4, k5, k6 = jax.random.split(key, 6)

    def reference(feats, labels, scale=32.0, margin=0.25):
        # Plain-JAX mirror of the PyTorch forward (f32 throughout).
        f = feats.astype(jnp.float32)
        norm = jnp.sqrt(jnp.sum(f * f, axis=-1, keepdims=True))
        fn = f / jnp.maximum(norm, 1e-12)
        sim = jnp.dot(fn, fn.T, precision=lax.Precision.HIGHEST,
                      preferred_element_type=jnp.float32)
        eq = labels[:, None] == labels[None, :]
        triu = jnp.triu(jnp.ones_like(eq), k=1)
        pos = eq & triu
        neg = (~eq) & triu
        alpha_p = jnp.maximum(-sim + 1.0 + margin, 0.0)
        alpha_n = jnp.maximum(sim + margin, 0.0)
        lp = jnp.sum(jnp.where(pos, jnp.exp(-scale * alpha_p * (sim - (1.0 - margin))), 0.0))
        ln = jnp.sum(jnp.where(neg, jnp.exp(scale * alpha_n * (sim - margin)), 0.0))
        return jnp.log(1.0 + lp * ln)

    # 1) Small batch, single tile, f32 MXU path.
    m, d = 8, 32
    feats = jax.random.normal(k1, (m, d), dtype=jnp.float32)
    labels = jax.random.randint(k2, (m,), 0, 3, dtype=jnp.int32)
    loss = circle_loss2(feats, labels)
    jax.block_until_ready(loss)
    ref = reference(feats, labels)
    assert jnp.allclose(loss, ref, rtol=2e-2, atol=2e-2), (loss, ref)

    # 2) m not a multiple of 8 exercises the padding / col<m guard.
    m2 = 10
    feats2 = jax.random.normal(k3, (m2, d), dtype=jnp.float32)
    labels2 = jax.random.randint(k4, (m2,), 0, 3, dtype=jnp.int32)
    loss2 = circle_loss2(feats2, labels2)
    jax.block_until_ready(loss2)
    ref2 = reference(feats2, labels2)
    assert jnp.allclose(loss2, ref2, rtol=2e-2, atol=2e-2), (loss2, ref2)

    # 3) Multi-tile grid (2x2 blocks, one below-diagonal tile skipped) + padding.
    #    d=256 keeps similarities small enough that the f32 exp sums stay far
    #    from overflow for both kernel and reference.
    m3, d3 = 300, 256
    feats3 = jax.random.normal(k5, (m3, d3), dtype=jnp.float32)
    labels3 = jax.random.randint(k6, (m3,), 0, 4, dtype=jnp.int32)
    loss3 = circle_loss2(feats3, labels3)
    jax.block_until_ready(loss3)
    ref3 = reference(feats3, labels3)
    assert jnp.allclose(loss3, ref3, rtol=2e-2, atol=2e-2), (loss3, ref3)

    # 4) bf16 MXU fast path; loose tolerance since SCALE=32 amplifies operand
    #    rounding inside the exponent.
    loss_bf16 = circle_loss2(feats, labels, mxu_dtype=jnp.bfloat16)
    jax.block_until_ready(loss_bf16)
    assert jnp.isfinite(loss_bf16)
    assert abs(float(loss_bf16) - float(ref)) < 0.1 * abs(float(ref)) + 1.0, (loss_bf16, ref)

    print("KERNEL_OK")
</pallas_src>

<mosaic_0001>
module attributes {stable_mosaic.version = 11 : i64} {
  func.func @_circle_loss_tile_kernel(%arg0: i32, %arg1: i32, %arg2: memref<8x32xf32, #tpu.memory_space<vmem>>, %arg3: memref<32x8xf32, #tpu.memory_space<vmem>>, %arg4: memref<8x1xi32, #tpu.memory_space<vmem>>, %arg5: memref<1x8xi32, #tpu.memory_space<vmem>>, %arg6: memref<8x1xf32, #tpu.memory_space<vmem>>, %arg7: memref<8x1xf32, #tpu.memory_space<vmem>>, %arg8: memref<8x8xf32, #tpu.memory_space<vmem>>, %arg9: memref<8x8xf32, #tpu.memory_space<vmem>>) attributes {dimension_semantics = [#tpu.dimension_semantics<parallel>, #tpu.dimension_semantics<arbitrary>], iteration_bounds = array<i64: 1, 1>, scalar_prefetch = 0 : i64, scratch_operands = 2 : i64, tpu.core_type = #tpu.core_type<tc>, window_params = [{transform_indices = @transform_0, window_bounds = array<i64: 8, 32>}, {transform_indices = @transform_1, window_bounds = array<i64: 32, 8>}, {transform_indices = @transform_2, window_bounds = array<i64: 8, 1>}, {transform_indices = @transform_3, window_bounds = array<i64: 1, 8>}, {transform_indices = @transform_4, window_bounds = array<i64: 8, 1>}, {transform_indices = @transform_5, window_bounds = array<i64: 8, 1>}]} {
    %0 = arith.cmpi sge, %arg1, %arg0 : i32
    %1 = arith.extui %0 : i1 to i32
    %c0_i32 = arith.constant 0 : i32
    %2 = arith.cmpi ne, %1, %c0_i32 : i32
    scf.if %2 {
      %3 = arith.cmpi eq, %arg1, %arg0 : i32
      %4 = arith.extui %3 : i1 to i32
      %c0_i32_0 = arith.constant 0 : i32
      %5 = arith.cmpi ne, %4, %c0_i32_0 : i32
      scf.if %5 {
        %cst_29 = arith.constant 0.000000e+00 : f32
        %57 = vector.broadcast %cst_29 : f32 to vector<8x8xf32>
        %c0_30 = arith.constant 0 : index
        %c0_31 = arith.constant 0 : index
        %58 = vector.load %arg8[%c0_30, %c0_31] : memref<8x8xf32, #tpu.memory_space<vmem>>, vector<8x8xf32>
        tpu.vector_store %arg8[%c0_30, %c0_31], %57 {strides = array<i32>} : memref<8x8xf32, #tpu.memory_space<vmem>>, vector<8x8xf32>,
        %cst_32 = arith.constant 0.000000e+00 : f32
        %59 = vector.broadcast %cst_32 : f32 to vector<8x8xf32>
        %c0_33 = arith.constant 0 : index
        %c0_34 = arith.constant 0 : index
        %60 = vector.load %arg9[%c0_33, %c0_34] : memref<8x8xf32, #tpu.memory_space<vmem>>, vector<8x8xf32>
        tpu.vector_store %arg9[%c0_33, %c0_34], %59 {strides = array<i32>} : memref<8x8xf32, #tpu.memory_space<vmem>>, vector<8x8xf32>,
      } else {
      }
      %c0 = arith.constant 0 : index
      %c0_1 = arith.constant 0 : index
      %6 = vector.load %arg2[%c0, %c0_1] : memref<8x32xf32, #tpu.memory_space<vmem>>, vector<8x32xf32>
      %c0_2 = arith.constant 0 : index
      %c0_3 = arith.constant 0 : index
      %7 = vector.load %arg3[%c0_2, %c0_3] : memref<32x8xf32, #tpu.memory_space<vmem>>, vector<32x8xf32>
      %cst = arith.constant dense<0.000000e+00> : vector<8x8xf32>
      %8 = tpu.matmul %6, %7, %cst {dimension_numbers = #tpu.dot_dimension_numbers<[1], [0], [0], [1], [0, 0, 1, 1], [], []>} : vector<8x32xf32>, vector<32x8xf32>, vector<8x8xf32> -> vector<8x8xf32>
      %c0_4 = arith.constant 0 : index
      %c0_5 = arith.constant 0 : index
      %9 = vector.load %arg4[%c0_4, %c0_5] : memref<8x1xi32, #tpu.memory_space<vmem>>, vector<8x1xi32>
      %c0_6 = arith.constant 0 : index
      %c0_7 = arith.constant 0 : index
      %10 = vector.load %arg5[%c0_6, %c0_7] : memref<1x8xi32, #tpu.memory_space<vmem>>, vector<1x8xi32>
      %11 = vector.broadcast %9 : vector<8x1xi32> to vector<8x8xi32>
      %12 = vector.broadcast %10 : vector<1x8xi32> to vector<8x8xi32>
      %13 = arith.cmpi eq, %11, %12 : vector<8x8xi32>
      %14 = tpu.iota {dimensions = array<i32: 0>} : vector<8x8xi32>
      %15 = tpu.iota {dimensions = array<i32: 1>} : vector<8x8xi32>
      %16 = arith.subi %15, %14 : vector<8x8xi32>
      %17 = arith.subi %arg0, %arg1 : i32
      %c8_i32 = arith.constant 8 : i32
      %18 = arith.muli %17, %c8_i32 : i32
      %19 = vector.broadcast %18 : i32 to vector<8x8xi32>
      %20 = arith.cmpi sgt, %16, %19 : vector<8x8xi32>
      %cst_8 = arith.constant 1.250000e+00 : f32
      %21 = vector.broadcast %cst_8 : f32 to vector<8x8xf32>
      %22 = arith.subf %21, %8 : vector<8x8xf32>
      %cst_9 = arith.constant 0.000000e+00 : f32
      %23 = vector.broadcast %cst_9 : f32 to vector<8x8xf32>
      %24 = arith.maximumf %22, %23 : vector<8x8xf32>
      %cst_10 = arith.constant 2.500000e-01 : f32
      %25 = vector.broadcast %cst_10 : f32 to vector<8x8xf32>
      %26 = arith.addf %8, %25 : vector<8x8xf32>
      %cst_11 = arith.constant 0.000000e+00 : f32
      %27 = vector.broadcast %cst_11 : f32 to vector<8x8xf32>
      %28 = arith.maximumf %26, %27 : vector<8x8xf32>
      %cst_12 = arith.constant -3.200000e+01 : f32
      %29 = vector.broadcast %cst_12 : f32 to vector<8x8xf32>
      %30 = arith.mulf %29, %24 : vector<8x8xf32>
      %cst_13 = arith.constant 7.500000e-01 : f32
      %31 = vector.broadcast %cst_13 : f32 to vector<8x8xf32>
      %32 = arith.subf %8, %31 : vector<8x8xf32>
      %33 = arith.mulf %30, %32 : vector<8x8xf32>
      %cst_14 = arith.constant 3.200000e+01 : f32
      %34 = vector.broadcast %cst_14 : f32 to vector<8x8xf32>
      %35 = arith.mulf %34, %28 : vector<8x8xf32>
      %cst_15 = arith.constant 2.500000e-01 : f32
      %36 = vector.broadcast %cst_15 : f32 to vector<8x8xf32>
      %37 = arith.subf %8, %36 : vector<8x8xf32>
      %38 = arith.mulf %35, %37 : vector<8x8xf32>
      %39 = arith.select %13, %33, %38 : vector<8x8xi1>, vector<8x8xf32>
      %40 = math.exp %39 : vector<8x8xf32>
      %c0_16 = arith.constant 0 : index
      %c0_17 = arith.constant 0 : index
      %41 = vector.load %arg8[%c0_16, %c0_17] : memref<8x8xf32, #tpu.memory_space<vmem>>, vector<8x8xf32>
      %42 = arith.andi %20, %13 : vector<8x8xi1>
      %cst_18 = arith.constant 0.000000e+00 : f32
      %43 = vector.broadcast %cst_18 : f32 to vector<8x8xf32>
      %44 = arith.select %42, %40, %43 : vector<8x8xi1>, vector<8x8xf32>
      %45 = arith.addf %41, %44 : vector<8x8xf32>
      %c0_19 = arith.constant 0 : index
      %c0_20 = arith.constant 0 : index
      %46 = vector.load %arg8[%c0_19, %c0_20] : memref<8x8xf32, #tpu.memory_space<vmem>>, vector<8x8xf32>
      tpu.vector_store %arg8[%c0_19, %c0_20], %45 {strides = array<i32>} : memref<8x8xf32, #tpu.memory_space<vmem>>, vector<8x8xf32>,
      %c0_21 = arith.constant 0 : index
      %c0_22 = arith.constant 0 : index
      %47 = vector.load %arg9[%c0_21, %c0_22] : memref<8x8xf32, #tpu.memory_space<vmem>>, vector<8x8xf32>
      %cst_23 = arith.constant dense<true> : vector<8x8xi1>
      %48 = arith.xori %13, %cst_23 : vector<8x8xi1>
      %49 = arith.andi %20, %48 : vector<8x8xi1>
      %cst_24 = arith.constant 0.000000e+00 : f32
      %50 = vector.broadcast %cst_24 : f32 to vector<8x8xf32>
      %51 = arith.select %49, %40, %50 : vector<8x8xi1>, vector<8x8xf32>
      %52 = arith.addf %47, %51 : vector<8x8xf32>
      %c0_25 = arith.constant 0 : index
      %c0_26 = arith.constant 0 : index
      %53 = vector.load %arg9[%c0_25, %c0_26] : memref<8x8xf32, #tpu.memory_space<vmem>>, vector<8x8xf32>
      tpu.vector_store %arg9[%c0_25, %c0_26], %52 {strides = array<i32>} : memref<8x8xf32, #tpu.memory_space<vmem>>, vector<8x8xf32>,
      %c0_i32_27 = arith.constant 0 : i32
      %54 = arith.cmpi eq, %arg1, %c0_i32_27 : i32
      %55 = arith.extui %54 : i1 to i32
      %c0_i32_28 = arith.constant 0 : i32
      %56 = arith.cmpi ne, %55, %c0_i32_28 : i32
      scf.if %56 {
        %c0_29 = arith.constant 0 : index
        %c0_30 = arith.constant 0 : index
        %57 = vector.load %arg8[%c0_29, %c0_30] : memref<8x8xf32, #tpu.memory_space<vmem>>, vector<8x8xf32>
        %cst_31 = arith.constant dense<0.000000e+00> : vector<8xf32>
        %58 = vector.multi_reduction <add>, %57, %cst_31 [1] : vector<8x8xf32> to vector<8xf32>
        %59 = vector.shape_cast %58 : vector<8xf32> to vector<8x1xf32>
        %c0_32 = arith.constant 0 : index
        %c0_33 = arith.constant 0 : index
        %60 = vector.load %arg6[%c0_32, %c0_33] : memref<8x1xf32, #tpu.memory_space<vmem>>, vector<8x1xf32>
        tpu.vector_store %arg6[%c0_32, %c0_33], %59 {strides = array<i32>} : memref<8x1xf32, #tpu.memory_space<vmem>>, vector<8x1xf32>,
        %c0_34 = arith.constant 0 : index
        %c0_35 = arith.constant 0 : index
        %61 = vector.load %arg9[%c0_34, %c0_35] : memref<8x8xf32, #tpu.memory_space<vmem>>, vector<8x8xf32>
        %cst_36 = arith.constant dense<0.000000e+00> : vector<8xf32>
        %62 = vector.multi_reduction <add>, %61, %cst_36 [1] : vector<8x8xf32> to vector<8xf32>
        %63 = vector.shape_cast %62 : vector<8xf32> to vector<8x1xf32>
        %c0_37 = arith.constant 0 : index
        %c0_38 = arith.constant 0 : index
        %64 = vector.load %arg7[%c0_37, %c0_38] : memref<8x1xf32, #tpu.memory_space<vmem>>, vector<8x1xf32>
        tpu.vector_store %arg7[%c0_37, %c0_38], %63 {strides = array<i32>} : memref<8x1xf32, #tpu.memory_space<vmem>>, vector<8x1xf32>,
      } else {
      }
    } else {
    }
    return
  }
  func.func @transform_0(%arg0: i32, %arg1: i32) -> (i32, i32) {
    %c0_i32 = arith.constant 0 : i32
    %c0_i32_0 = arith.constant 0 : i32
    return %arg0, %c0_i32 : i32, i32
  }
  func.func @transform_1(%arg0: i32, %arg1: i32) -> (i32, i32) {
    %c0_i32 = arith.constant 0 : i32
    %c0_i32_0 = arith.constant 0 : i32
    return %c0_i32, %arg1 : i32, i32
  }
  func.func @transform_2(%arg0: i32, %arg1: i32) -> (i32, i32) {
    %c0_i32 = arith.constant 0 : i32
    %c0_i32_0 = arith.constant 0 : i32
    return %arg0, %c0_i32 : i32, i32
  }
  func.func @transform_3(%arg0: i32, %arg1: i32) -> (i32, i32) {
    %c0_i32 = arith.constant 0 : i32
    %c0_i32_0 = arith.constant 0 : i32
    return %c0_i32, %arg1 : i32, i32
  }
  func.func @transform_4(%arg0: i32, %arg1: i32) -> (i32, i32) {
    %c0_i32 = arith.constant 0 : i32
    %c0_i32_0 = arith.constant 0 : i32
    return %arg0, %c0_i32 : i32, i32
  }
  func.func @transform_5(%arg0: i32, %arg1: i32) -> (i32, i32) {
    %c0_i32 = arith.constant 0 : i32
    %c0_i32_0 = arith.constant 0 : i32
    return %arg0, %c0_i32 : i32, i32
  }
}

</mosaic_0001>

<llo_original>
// kernel: tpu_custom_call.1
$region0: #{tpu_custom_call.1}
  #allocation0 [shape = 'u32[]', space=smem, size = 0x4, offset = 0x4, fixed_abs, tag = 'smem constant byte address 0x4 - core index']
  #allocation1 [shape = 'u32[144,128]{1,0:T(1,128)}', space=vmem, size = 0x12000, scoped, tag = 'internal scratch']
  #allocation2 [shape = 'f32[8,8]{1,0:T(8,128)}', space=vmem, size = 0x1000, scoped, tag = 'scratch operand']
  #allocation3 [shape = 'f32[8,8]{1,0:T(8,128)}', space=vmem, size = 0x1000, scoped, tag = 'scratch operand']
  %s0 = inlined_call_operand.vmem [shape: f32[8,32], index: 0, kind: input, shape index: {}]
  %s1 = inlined_call_operand.vmem [shape: f32[32,8], index: 1, kind: input, shape index: {}]
  %s2 = inlined_call_operand.vmem [shape: s32[8,1], index: 2, kind: input, shape index: {}]
  %s3 = inlined_call_operand.vmem [shape: s32[1,8], index: 3, kind: input, shape index: {}]
  %s4 = inlined_call_operand.vmem [shape: f32[8,1], index: 4, kind: output, shape index: {0}]
  %s5 = inlined_call_operand.vmem [shape: f32[8,1], index: 5, kind: output, shape index: {1}]
  %6 = xla_tuple %s4, %s5
  %s7 = sld [smem:[#allocation0]]
  $region46: #{tpu_custom_call.1} parent=0
    _
  %s9 = ssub.s32 1, %s7
  %s10 = scalar_select 0, %s9, %s7
  // Predicated region
  $region2: #{tpu_custom_call.1} parent=0 // pred_check
    _
  $region3: #{tpu_custom_call.1} parent=0 // pred_check_branch
    %12 = sbr.rel (0) target = $region5
  $region4: #{tpu_custom_call.1} parent=0 // pred_region
    _
  $region5: #{tpu_custom_call.1} parent=0 // pred_fallthru
    _
  // Predicated region
  $region6: #{tpu_custom_call.1} parent=0 // pred_check
    _
  $region7: #{tpu_custom_call.1} parent=0 // pred_check_branch
    %14 = sbr.rel (0) target = $region9
  $region8: #{tpu_custom_call.1} parent=0 // pred_region
    _
  $region9: #{tpu_custom_call.1} parent=0 // pred_fallthru
    _
  // Predicated region
  $region10: #{tpu_custom_call.1} parent=0 // pred_check
    _
  $region11: #{tpu_custom_call.1} parent=0 // pred_check_branch
    %16 = sbr.rel (0) target = $region13
  $region12: #{tpu_custom_call.1} parent=0 // pred_region
    _
  $region13: #{tpu_custom_call.1} parent=0 // pred_fallthru
    _
  // Predicated region
  $region14: #{tpu_custom_call.1} parent=0 // pred_check
    _
  $region15: #{tpu_custom_call.1} parent=0 // pred_check_branch
    %18 = sbr.rel (0) target = $region17
  $region16: #{tpu_custom_call.1} parent=0 // pred_region
    _
  $region17: #{tpu_custom_call.1} parent=0 // pred_fallthru
    _
  %p19 = scmp.ge.s32.totalorder 0, 0
  // Predicated region
  $region18: #{tpu_custom_call.1} parent=0 // pred_check
    %p20 = pneg %p19
  $region19: #{tpu_custom_call.1} parent=0 // pred_check_branch
    %22 = sbr.rel (%p20) target = $region21
  $region20: #{tpu_custom_call.1} parent=0 // pred_region
    %p23 = scmp.eq.s32.totalorder 0, 0
    // Predicated region
    $region22: #{tpu_custom_call.1} parent=20 // pred_check
      %p24 = pneg %p23
    $region23: #{tpu_custom_call.1} parent=20 // pred_check_branch
      %26 = sbr.rel (%p24) target = $region25
    $region24: #{tpu_custom_call.1} parent=20 // pred_region
      %vm27 = vcmask 64512
      %28 = vst.msk [vmem:[#allocation2] sm:$0xff] %vm27, 0.0
      %29 = vst.msk [vmem:[#allocation3] sm:$0xff] %vm27, 0.0
    $region25: #{tpu_custom_call.1} parent=20 // pred_fallthru
      _
    %v30 = vld [vmem:[%s0] sm:$0xff]
    %v31 = vld [vmem:[%s1] sm:$0xff]
    %v32 = vld [vmem:[%s1 + $0x8] sm:$0xff]
    %v33 = vld [vmem:[%s1 + $0x10] sm:$0xff]
    %v34 = vld [vmem:[%s1 + $0x18] sm:$0xff]
    %vm35 = vcmask 261120
    %v37 = vsel %vm35, %v30, 0
    %39 = vmatprep.subr.mxu0 0.0
    %40 = vmatpush1.msra.mxu0 %v31
    %41 = vmatprep.subr.mxu0 0.0
    %42 = vmatpush1.msra.mxu0 %v32
    %43 = vmatprep.subr.mxu0 0.0
    %44 = vmatpush1.msra.mxu0 %v33
    %45 = vmatprep.subr.mxu0 0.0
    %46 = vmatpush1.msra.mxu0 %v34
    %47 = vmatprep.subr.mxu0 0.0
    %48 = vmatpush1.msra.mxu0 0.0
    %49 = vmatprep.subr.mxu0 0.0
    %50 = vmatpush1.msra.mxu0 0.0
    %51 = vmatprep.subr.mxu0 0.0
    %52 = vmatpush1.msra.mxu0 0.0
    %53 = vmatprep.subr.mxu0 0.0
    %54 = vmatpush1.msra.mxu0 0.0
    %55 = vmatprep.subr.mxu0 0.0
    %56 = vmatpush1.msra.mxu0 0.0
    %57 = vmatprep.subr.mxu0 0.0
    %58 = vmatpush1.msra.mxu0 0.0
    %59 = vmatprep.subr.mxu0 0.0
    %60 = vmatpush1.msra.mxu0 0.0
    %61 = vmatprep.subr.mxu0 0.0
    %62 = vmatpush1.msra.mxu0 0.0
    %63 = vmatprep.subr.mxu0 0.0
    %64 = vmatpush1.msra.mxu0 0.0
    %65 = vmatprep.subr.mxu0 0.0
    %66 = vmatpush1.msra.mxu0 0.0
    %67 = vmatprep.subr.mxu0 0.0
    %68 = vmatpush1.msra.mxu0 0.0
    %69 = vmatprep.subr.mxu0 0.0
    %70 = vmatpush1.msra.mxu0 0.0
    %71 = vmatprep.subr.mxu0 0.0
    %72 = vmatpush1.msra.mxu0 0.0
    %73 = vmatprep.subr.mxu0 0.0
    %74 = vmatpush1.msra.mxu0 0.0
    %75 = vmatprep.subr.mxu0 0.0
    %76 = vmatpush1.msra.mxu0 0.0
    %77 = vmatprep.subr.mxu0 0.0
    %78 = vmatpush1.msra.mxu0 0.0
    %79 = vmatprep.subr.mxu0 0.0
    %80 = vmatpush1.msra.mxu0 0.0
    %81 = vmatprep.subr.mxu0 0.0
    %82 = vmatpush1.msra.mxu0 0.0
    %83 = vmatprep.subr.mxu0 0.0
    %84 = vmatpush1.msra.mxu0 0.0
    %85 = vmatprep.subr.mxu0 0.0
    %86 = vmatpush1.msra.mxu0 0.0
    %87 = vmatprep.subr.mxu0 0.0
    %88 = vmatpush1.msra.mxu0 0.0
    %89 = vmatprep.subr.mxu0 0.0
    %90 = vmatpush1.msra.mxu0 0.0
    %91 = vmatprep.subr.mxu0 0.0
    %92 = vmatpush1.msra.mxu0 0.0
    %93 = vmatprep.subr.mxu0 0.0
    %94 = vmatpush1.msra.mxu0 0.0
    %95 = vmatprep.subr.mxu0 0.0
    %96 = vmatpush1.msra.mxu0 0.0
    %97 = vmatprep.subr.mxu0 0.0
    %98 = vmatpush1.msra.mxu0 0.0
    %99 = vmatprep.subr.mxu0 0.0
    %100 = vmatpush1.msra.mxu0 0.0
    %101 = vmatprep.subr.mxu0 0.0
    %102 = vmatpush1.msra.mxu0 0.0
    %103 = vmatprep.mubr.f32.mxu0 0.0
    %104 = vmatmul.mubr.f32.gmra.mrb[0].mxu0 %v37
    %v105 = vpop.f32.mrb[0].mxu0
    %v106 = vadd.f32 0.0, %v105
    %v107 = vpop.f32.mrb[0].mxu0
    %108 = vdwg.mxu0
    %v109 = vld [vmem:[%s2] sm:$0xff]
    %v110 = vld [vmem:[%s3] sm:$0x1]
    %111 = vset.pattern.permute.xlu0 0
    %112 = vperm.xlu0 %111, %v109
    %v113 = vpop.permute.xlu0 %112
    %v114 = vlaneseq
    %v115 = vshrl.u32 %v114, 7
    %v116 = vsub.s32 0, %v115
    %v117 = vrot.slane %v110, %v116
    %vm118 = vcmp.eq.s32.totalorder %v113, %v117
    %v119 = vlaneseq
    %v120 = vshrl.u32 %v119, 7
    %v121 = vlaneseq
    %v122 = vand.u32 %v121, 127
    %v123 = vsub.s32 %v122, %v120
    %s124 = ssub.s32 0, 0
    %s125 = smul.u32 %s124, 8
    %v126 = vstv %s125
    %vm127 = vcmp.gt.s32.totalorder %v123, %v126
    %v128 = vsub.f32 1.25, %v106
    %v129 = vmax.f32 %v128, 0.0
    %v130 = vadd.f32 %v106, 0.25
    %v131 = vmax.f32 %v130, 0.0
    %v132 = vmul.f32 %v129, -32.0
    %v133 = vsub.f32 %v106, 0.75
    %v134 = vmul.f32 %v132, %v133
    %v135 = vmul.f32 %v131, 32.0
    %v136 = vsub.f32 %v106, 0.25
    %v137 = vmul.f32 %v135, %v136
    %v138 = vsel %vm118, %v134, %v137
    %v139 = vmul.f32 %v138, 1.442695
    %v140 = vpow.pop %v139
    %v141 = vld [vmem:[#allocation2] sm:$0xff]
    %vm142 = vmand %vm127, %vm118
    %v143 = vsel %vm142, %v140, 0.0
    %v144 = vadd.f32 %v141, %v143
    %vm145 = vcmask 64512
    %146 = vst.msk [vmem:[#allocation2] sm:$0xff] %vm145, %v144
    %v147 = vld [vmem:[#allocation3] sm:$0xff]
    %vm148 = vmxor %vm118, 1
    %vm149 = vmand %vm127, %vm148
    %v150 = vsel %vm149, %v140, 0.0
    %v151 = vadd.f32 %v147, %v150
    %152 = vst.msk [vmem:[#allocation3] sm:$0xff] %vm145, %v151
    %p153 = scmp.eq.s32.totalorder 0, 0
    // Predicated region
    $region26: #{tpu_custom_call.1} parent=20 // pred_check
      %p154 = pneg %p153
    $region27: #{tpu_custom_call.1} parent=20 // pred_check_branch
      %156 = sbr.rel (%p154) target = $region29
    $region28: #{tpu_custom_call.1} parent=20 // pred_region
      %v157 = vld [vmem:[#allocation2] sm:$0xff]
      %v158 = vsel %vm145, %v157, 0.0
      %159 = vadd.xlane.f32.xlu0 %v158
      %v160 = vpop.xlane.xlu0 %159
      %vm161 = vcmask 7168
      %162 = vst.msk [vmem:[%s4] sm:$0xff] %vm161, %v160
      %v163 = vld [vmem:[#allocation3] sm:$0xff]
      %v164 = vsel %vm145, %v163, 0.0
      %165 = vadd.xlane.f32.xlu0 %v164
      %v166 = vpop.xlane.xlu0 %165
      %167 = vst.msk [vmem:[%s5] sm:$0xff] %vm161, %v166
    $region29: #{tpu_custom_call.1} parent=20 // pred_fallthru
      _
  $region21: #{tpu_custom_call.1} parent=0 // pred_fallthru
    _
  // Predicated region
  $region30: #{tpu_custom_call.1} parent=0 // pred_check
    _
  $region31: #{tpu_custom_call.1} parent=0 // pred_check_branch
    %169 = sbr.rel (0) target = $region33
  $region32: #{tpu_custom_call.1} parent=0 // pred_region
    _
  $region33: #{tpu_custom_call.1} parent=0 // pred_fallthru
    _
  // Predicated region
  $region34: #{tpu_custom_call.1} parent=0 // pred_check
    _
  $region35: #{tpu_custom_call.1} parent=0 // pred_check_branch
    %171 = sbr.rel (0) target = $region37
  $region36: #{tpu_custom_call.1} parent=0 // pred_region
    _
  $region37: #{tpu_custom_call.1} parent=0 // pred_fallthru
    _
  // Predicated region
  $region38: #{tpu_custom_call.1} parent=0 // pred_check
    _
  $region39: #{tpu_custom_call.1} parent=0 // pred_check_branch
    %173 = sbr.rel (0) target = $region41
  $region40: #{tpu_custom_call.1} parent=0 // pred_region
    _
  $region41: #{tpu_custom_call.1} parent=0 // pred_fallthru
    _
  // Predicated region
  $region42: #{tpu_custom_call.1} parent=0 // pred_check
    _
  $region43: #{tpu_custom_call.1} parent=0 // pred_check_branch
    %175 = sbr.rel (0) target = $region45
  $region44: #{tpu_custom_call.1} parent=0 // pred_region
    _
  $region45: #{tpu_custom_call.1} parent=0 // pred_fallthru
    _

</llo_original>
